<compile_context>
chip_gen: v7x
topology: tpu7x:2x2x1
jax: 0.10.0
libtpu: 0.0.40
codegen_flags: <defaults>
</compile_context>

<pallas_src>
import jax
import jax.numpy as jnp
from jax.experimental import pallas as pl
from jax.experimental.pallas import tpu as pltpu

QT_PARAM = 128.0                 # number of quantization levels (deterministic "parameter")
_INV_QT_PARAM = 1.0 / QT_PARAM

_LANE = 1024                             # lane-dense last dim (multiple of 128)
_TARGET_BLOCK_BYTES = 8 * 1024 * 1024    # 8 MiB blocks; 4x double-buffered = 32 MiB live
_VMEM_MARGIN_BYTES = 4 * 1024 * 1024     # headroom for compiler-internal scratch
_VMEM_FLOOR_BYTES = 16 * 1024 * 1024


def _round_up(a, b):
    return ((a + b - 1) // b) * b


# ---------------------------------------------------------------------------
# Pallas kernel: elementwise non-differentiable quantization (ori_f forward)
# ---------------------------------------------------------------------------
def _qt_kernel(x_ref, o_ref):
    x = x_ref[...]
    if x.dtype != jnp.float32:
        x = x.astype(jnp.float32)
    y = jnp.round(x * QT_PARAM) * _INV_QT_PARAM
    o_ref[...] = y.astype(o_ref.dtype)


def qt_non_diff_pallas(x):
    """Elementwise quantization of an arbitrarily-shaped array on TPU."""
    orig_shape = x.shape
    orig_dtype = x.dtype
    x_flat = x.reshape(-1)
    n = x_flat.shape[0]
    if n == 0:
        return x

    itemsize = jnp.dtype(orig_dtype).itemsize
    # Sublane granularity by element width (f32: 8, bf16: 16, int8: 32).
    sublane = max(8, 32 // max(itemsize, 1))

    # Lane-dense column width (multiple of 128); shrink for tiny inputs so
    # they are not padded excessively.
    lane = _LANE
    while lane > 128 and lane > n:
        lane //= 2

    rows = pl.cdiv(n, lane)
    padded_n = rows * lane           # pad only to a whole final row (< lane elems)
    if padded_n != n:
        x_flat = jnp.pad(x_flat, (0, padded_n - n))
    x2d = x_flat.reshape(rows, lane)

    # Byte-based block sizing: constant per-step amortization across dtypes.
    max_tile_r = max(
        sublane,
        (_TARGET_BLOCK_BYTES // (lane * itemsize)) // sublane * sublane,
    )
    # v7x megacore: keep at least 2 grid steps when there is enough work so
    # both TensorCores get a share of the "parallel" grid (no-op on v5e/v6e).
    half_rows = _round_up(pl.cdiv(rows, 2), sublane)
    tile_r = min(max_tile_r, half_rows)
    # Never exceed the array; a full-first-dim block is always legal.
    tile_r = min(tile_r, rows)

    # Non-divisible grid: the partial last block is masked by Pallas, which is
    # safe for this purely elementwise op (rows need not be sublane-padded).
    grid = (pl.cdiv(rows, tile_r),)

    block_bytes = tile_r * lane * itemsize
    vmem_limit = int(max(4 * block_bytes + _VMEM_MARGIN_BYTES, _VMEM_FLOOR_BYTES))

    y2d = pl.pallas_call(
        _qt_kernel,
        out_shape=jax.ShapeDtypeStruct((rows, lane), orig_dtype),
        grid=grid,
        in_specs=[pl.BlockSpec((tile_r, lane), lambda i: (i, 0))],
        out_specs=pl.BlockSpec((tile_r, lane), lambda i: (i, 0)),
        compiler_params=pltpu.CompilerParams(
            dimension_semantics=("parallel",),
            vmem_limit_bytes=vmem_limit,
        ),
    )(x2d)

    if padded_n != n:
        return y2d.reshape(-1)[:n].reshape(orig_shape)
    return y2d.reshape(orig_shape)


# ---------------------------------------------------------------------------
# BPDA glue: forward = ori_f (Pallas kernel), backward = grad of sub_f
# ---------------------------------------------------------------------------
# sub_f is the differentiable surrogate of the quantization defense: identity
# (straight-through estimator).  Its VJP is the identity on the cotangent, so
# no residuals need to be saved.
@jax.custom_vjp
def bpda_qt(x):
    # forward: ori_f(*args)  -- elementwise quantization in Pallas
    return qt_non_diff_pallas(x)


def _bpda_fwd(x):
    # Identity surrogate: the backward needs nothing from the forward, so do
    # not keep the activation alive in HBM.  (For a general sub_f you would
    # save the inputs here and re-run jax.vjp(sub_f, ...) in the backward.)
    return bpda_qt(x), None


def _bpda_bwd(_, g):
    # BPDA backward: back-prop through the identity surrogate -> pass g through.
    return (g,)


bpda_qt.defvjp(_bpda_fwd, _bpda_bwd)

# TODO(synk): the torch.autograd.Function / inspect-based kwarg remapping of the
# original BPDA class is pure Python glue with no Pallas equivalent; it is
# reproduced here with jax.custom_vjp instead.


if __name__ == "__main__":
    key = jax.random.PRNGKey(0)
    # Small NCHW input consistent with an elementwise defense: batch=2, C=4, 16x16
    x = jax.random.uniform(key, (2, 4, 16, 16), dtype=jnp.float32,
                           minval=-1.0, maxval=1.0)

    y = bpda_qt(x)
    y = jax.block_until_ready(y)

    # Correctness check against plain-JAX reference of ori_f
    y_ref = jnp.round(x * QT_PARAM) / QT_PARAM
    assert y.shape == x.shape and y.dtype == x.dtype
    assert jnp.max(jnp.abs(y - y_ref)) < 1e-6

    # Sanity: BPDA gradient is straight-through (identity sub_f -> grad == ones)
    g = jax.grad(lambda a: jnp.sum(bpda_qt(a)))(x)
    g = jax.block_until_ready(g)
    assert jnp.allclose(g, jnp.ones_like(x))

    # Non-128-aligned shape: exercises the whole-row pad + trailing slice path.
    x2 = jax.random.uniform(jax.random.PRNGKey(1), (2, 3, 28, 28), jnp.float32)
    y2 = jax.block_until_ready(bpda_qt(x2))
    assert jnp.max(jnp.abs(y2 - jnp.round(x2 * QT_PARAM) / QT_PARAM)) < 1e-6

    # Larger, lane-divisible shape: no pad/slice, multi-step parallel grid with
    # a (possibly partial) masked last block.
    x3 = jax.random.uniform(jax.random.PRNGKey(2), (8, 4, 224, 224), jnp.float32)
    y3 = jax.block_until_ready(bpda_qt(x3))
    assert jnp.max(jnp.abs(y3 - jnp.round(x3 * QT_PARAM) / QT_PARAM)) < 1e-6

    print("KERNEL_OK")
</pallas_src>

<mosaic_0001>
module attributes {stable_mosaic.version = 11 : i64} {
  func.func @_qt_kernel(%arg0: i32, %arg1: memref<2x1024xf32, #tpu.memory_space<vmem>>, %arg2: memref<2x1024xf32, #tpu.memory_space<vmem>>) attributes {dimension_semantics = [#tpu.dimension_semantics<parallel>], iteration_bounds = array<i64: 1>, scalar_prefetch = 0 : i64, scratch_operands = 0 : i64, tpu.core_type = #tpu.core_type<tc>, window_params = [{transform_indices = @transform_0, window_bounds = array<i64: 2, 1024>}, {transform_indices = @transform_1, window_bounds = array<i64: 2, 1024>}]} {
    %c0 = arith.constant 0 : index
    %c0_0 = arith.constant 0 : index
    %0 = vector.load %arg1[%c0, %c0_0] : memref<2x1024xf32, #tpu.memory_space<vmem>>, vector<2x1024xf32>
    %cst = arith.constant 1.280000e+02 : f32
    %1 = vector.broadcast %cst : f32 to vector<2x1024xf32>
    %2 = arith.mulf %0, %1 : vector<2x1024xf32>
    %3 = math.roundeven %2 : vector<2x1024xf32>
    %cst_1 = arith.constant 7.812500e-03 : f32
    %4 = vector.broadcast %cst_1 : f32 to vector<2x1024xf32>
    %5 = arith.mulf %3, %4 : vector<2x1024xf32>
    %c0_2 = arith.constant 0 : index
    %c0_3 = arith.constant 0 : index
    %6 = vector.load %arg2[%c0_2, %c0_3] : memref<2x1024xf32, #tpu.memory_space<vmem>>, vector<2x1024xf32>
    tpu.vector_store %arg2[%c0_2, %c0_3], %5 {strides = array<i32>} : memref<2x1024xf32, #tpu.memory_space<vmem>>, vector<2x1024xf32>,
    return
  }
  func.func @transform_0(%arg0: i32) -> (i32, i32) {
    %c0_i32 = arith.constant 0 : i32
    %c0_i32_0 = arith.constant 0 : i32
    return %arg0, %c0_i32 : i32, i32
  }
  func.func @transform_1(%arg0: i32) -> (i32, i32) {
    %c0_i32 = arith.constant 0 : i32
    %c0_i32_0 = arith.constant 0 : i32
    return %arg0, %c0_i32 : i32, i32
  }
}

</mosaic_0001>

<llo_original>
// kernel: tpu_custom_call.1
$region0: #{tpu_custom_call.1}
  #allocation0 [shape = 'u32[]', space=smem, size = 0x4, offset = 0x4, fixed_abs, tag = 'smem constant byte address 0x4 - core index']
  #allocation1 [shape = 'u32[144,128]{1,0:T(1,128)}', space=vmem, size = 0x12000, scoped, tag = 'internal scratch']
  %s0 = inlined_call_operand.hbm [shape: f32[2,1024], index: 0, kind: input, shape index: {}]
  %s1 = inlined_call_operand.hbm [shape: f32[2,1024], index: 1, kind: output, shape index: {}]
  %s2 = sld [smem:[#allocation0]]
  $region18: #{tpu_custom_call.1} parent=0
    _
  %s4 = ssub.s32 1, %s2
  %s5 = scalar_select 0, %s4, %s2
  $region1: #{tpu_custom_call.1} parent=0
    #allocation2 [shape = 'u8[8192]{0}', space=vmem, size = 0x2000, scoped, tag = 'input window, operand 0, single buffered']
    #allocation3 [shape = 's32[1]{0}', space=sflag, size = 0x4, scoped, tag = 'scoped memory for tpu_custom_call.1']
    #allocation4 [shape = 's32[1]{0}', space=sflag, size = 0x4, scoped, tag = 'scoped memory for tpu_custom_call.1']
    #allocation5 [shape = 'u8[8192]{0}', space=vmem, size = 0x2000, scoped, tag = 'output window, operand 0, single buffered']
    %6 = vsyncpa [#allocation3], 0
    %7 = vsyncpa [#allocation4], 0
    // Predicated region
    $region2: #{tpu_custom_call.1} parent=1 // pred_check
      _
    $region3: #{tpu_custom_call.1} parent=1 // pred_check_branch
      %9 = sbr.rel (0) target = $region5
    $region4: #{tpu_custom_call.1} parent=1 // pred_region
      %s11 = ssub.s32 256, 256
      %12 = vsyncadd [#allocation3], %s11
      %s14 = sshll.u32 [#allocation2], 4
      %s15 = int_to_ptr.vmem [resolvable:$true] %s14
      %17 = dma.hbm_to_vmem [thread:$0]  %s0, 256, %s15, [#allocation3]
    $region5: #{tpu_custom_call.1} parent=1 // pred_fallthru
      _
    // Predicated region
    $region6: #{tpu_custom_call.1} parent=1 // pred_check
      _
    $region7: #{tpu_custom_call.1} parent=1 // pred_check_branch
      %19 = sbr.rel (0) target = $region9
    $region8: #{tpu_custom_call.1} parent=1 // pred_region
      %20 = dma.done [#allocation3], 256
    $region9: #{tpu_custom_call.1} parent=1 // pred_fallthru
      _
    %v21 = vld [vmem:[#allocation2] sm:$0xff]
    %v22 = vld [vmem:[#allocation2 + $0x8] sm:$0xff]
    %v23 = vmul.f32 %v21, 128.0
    %v24 = vmul.f32 %v22, 128.0
    %v25 = vround.ne.pseudo %v23
    %v26 = vround.ne.pseudo %v24
    %v27 = vmul.f32 %v25, 0.0078125
    %v28 = vmul.f32 %v26, 0.0078125
    %29 = vst [vmem:[#allocation5] sm:$0xff] %v27
    %30 = vst [vmem:[#allocation5 + $0x8] sm:$0xff] %v28
    // Predicated region
    $region10: #{tpu_custom_call.1} parent=1 // pred_check
      _
    $region11: #{tpu_custom_call.1} parent=1 // pred_check_branch
      %32 = sbr.rel (0) target = $region13
    $region12: #{tpu_custom_call.1} parent=1 // pred_region
      %s34 = ssub.s32 256, 256
      %35 = vsyncadd [#allocation4], %s34
      %s37 = sshll.u32 [#allocation5], 4
      %s38 = int_to_ptr.vmem [resolvable:$true] %s37
      %40 = dma.vmem_to_hbm [thread:$0]  %s38, 256, %s1, [#allocation4]
    $region13: #{tpu_custom_call.1} parent=1 // pred_fallthru
      _
    // Predicated region
    $region14: #{tpu_custom_call.1} parent=1 // pred_check
      _
    $region15: #{tpu_custom_call.1} parent=1 // pred_check_branch
      %42 = sbr.rel (0) target = $region17
    $region16: #{tpu_custom_call.1} parent=1 // pred_region
      %43 = dma.done [#allocation4], 256
    $region17: #{tpu_custom_call.1} parent=1 // pred_fallthru
      _
    %44 = vsyncpa [#allocation3], 1
    %45 = vsyncpa [#allocation4], 1

</llo_original>
